<compile_context>
chip_gen: v7x
topology: tpu7x:2x2x1
jax: 0.10.0
libtpu: 0.0.40
codegen_flags: <defaults>
</compile_context>

<pallas_src>
import jax
import jax.numpy as jnp
from jax.experimental import pallas as pl
from jax.experimental.pallas import tpu as pltpu


_MAX_OUTSTANDING_DMAS = 4


def _pick_lane_width(total_elems: int) -> int:
    """Largest lane width (multiple of 128) that evenly divides total_elems."""
    for lanes in (4096, 2048, 1024, 512, 256, 128):
        if total_elems % lanes == 0:
            return lanes
    return 0


def _chunk_rows(rows: int, max_chunks: int, align: int):
    """Split [0, rows) into <= max_chunks contiguous (start, size) pieces.

    All but the last chunk are multiples of `align` rows so chunk byte offsets
    stay aligned; chunk sizes are near-uniform for the DMA engine.
    """
    if max_chunks <= 1 or rows <= align:
        return [(0, rows)]
    n = min(max_chunks, max(1, rows // align))
    if n <= 1:
        return [(0, rows)]
    base = max(align, ((rows // n) // align) * align)
    chunks = []
    start = 0
    for _ in range(n - 1):
        if start + base >= rows:
            break
        chunks.append((start, base))
        start += base
    chunks.append((start, rows - start))
    return chunks


def _make_hbm_copy_kernel(chunks):
    """Kernel issuing one async HBM->HBM DMA per (static) chunk, then waiting."""

    def kernel(x_ref, o_ref, sem):
        copies = []
        for i, (start, size) in enumerate(chunks):
            cp = pltpu.make_async_copy(
                x_ref.at[pl.ds(start, size), :],
                o_ref.at[pl.ds(start, size), :],
                sem.at[i],
            )
            cp.start()
            copies.append(cp)
        for cp in copies:
            cp.wait()

    return kernel


def reshape_to_batch(
    x: jax.Array,
    out_channels: int,
    *,
    materialize: bool = False,
) -> jax.Array:
    """[n, c, h, w] -> [n * (c // out_channels), out_channels, h, w].

    materialize=False (default): metadata-only jnp.reshape (recommended).
    materialize=True: returns a freshly written buffer via chunked HBM->HBM DMA.
    """
    assert x.ndim == 4, "must have 4 dims"
    n, c, h, w = x.shape
    assert c % out_channels == 0, f"{c} is not divisible by {out_channels}"
    num_views = c // out_channels
    out_shape = (n * num_views, out_channels, h, w)

    # Recommended path: a contiguous NCHW reshape is metadata-only.
    if not materialize or x.size == 0:
        return jnp.reshape(x, out_shape)

    total = x.size
    itemsize = jnp.dtype(x.dtype).itemsize

    lanes = _pick_lane_width(total)
    if lanes:
        # Lane-dense 2D view: chunk along rows (chunk offsets stay aligned to
        # dtype-native sublane multiples of full rows -> contiguous DMAs).
        rows, cols = total // lanes, lanes
        sublane = max(1, 32 // itemsize)  # 8 f32, 16 bf16, 32 int8/fp8
        chunks = _chunk_rows(rows, _MAX_OUTSTANDING_DMAS, sublane)
    else:
        # Element count not a multiple of 128: still materialize, but with a
        # single whole-array DMA over a (lead, rest) contiguous 2D view.
        rows, cols = out_shape[0], total // out_shape[0]
        chunks = [(0, rows)]

    x2 = jnp.reshape(x, (rows, cols))  # metadata-only flat view
    kernel = _make_hbm_copy_kernel(chunks)

    flat_out = pl.pallas_call(
        kernel,
        out_shape=jax.ShapeDtypeStruct((rows, cols), x.dtype),
        in_specs=[pl.BlockSpec(memory_space=pl.ANY)],   # raw HBM ref, no auto-DMA
        out_specs=pl.BlockSpec(memory_space=pl.ANY),    # raw HBM ref, no auto-DMA
        scratch_shapes=[pltpu.SemaphoreType.DMA((len(chunks),))],
        cost_estimate=pl.CostEstimate(
            flops=0,
            transcendentals=0,
            bytes_accessed=2 * total * itemsize,
        ),
    )(x2)

    # Metadata-only reshape back to the module's output shape.
    return jnp.reshape(flat_out, out_shape)


if __name__ == "__main__":
    key = jax.random.PRNGKey(0)

    # Shapes consistent with the module's forward.
    n, c, h, w = 2, 4, 16, 16
    out_channels = 2
    x = jax.random.normal(key, (n, c, h, w), dtype=jnp.float32)
    ref = jnp.reshape(x, (n * (c // out_channels), out_channels, h, w))

    # Default (recommended) path: metadata-only reshape.
    y_view = jax.block_until_ready(reshape_to_batch(x, out_channels))
    assert y_view.shape == ref.shape and y_view.dtype == x.dtype
    assert jnp.array_equal(y_view, ref), "mismatch (view path)"

    # Materializing path: chunked HBM->HBM DMA copy via the Pallas kernel.
    y_copy = jax.block_until_ready(
        reshape_to_batch(x, out_channels, materialize=True))
    assert y_copy.shape == ref.shape and y_copy.dtype == x.dtype
    assert jnp.array_equal(y_copy, ref), "mismatch (DMA copy path)"

    # Second check: larger channel count / spatial, bf16, materialized.
    key2 = jax.random.PRNGKey(0)
    n2, c2, h2, w2 = 2, 8, 32, 64
    oc2 = 4
    x2 = jax.random.normal(key2, (n2, c2, h2, w2), dtype=jnp.bfloat16)
    ref2 = jnp.reshape(x2, (n2 * (c2 // oc2), oc2, h2, w2))
    y2 = jax.block_until_ready(reshape_to_batch(x2, oc2, materialize=True))
    assert y2.shape == ref2.shape and y2.dtype == x2.dtype
    assert jnp.array_equal(y2, ref2), "mismatch vs reference reshape (bf16)"

    print("KERNEL_OK")
</pallas_src>

<mosaic_0001>
module attributes {stable_mosaic.version = 11 : i64} {
  func.func @kernel(%arg0: memref<1x2048xf32, #tpu.memory_space<any>>, %arg1: memref<1x2048xf32, #tpu.memory_space<any>>, %arg2: memref<1x!tpu.dma_semaphore, #tpu.memory_space<semaphore_mem>>) attributes {dimension_semantics = [], scalar_prefetch = 0 : i64, scratch_operands = 1 : i64, tpu.core_type = #tpu.core_type<tc>} {
    %c0_i32 = arith.constant 0 : i32
    %c0_i32_0 = arith.constant 0 : i32
    %c0_i32_1 = arith.constant 0 : i32
    %0 = tpu.memref_slice %arg0[%c0_i32_0, %c0_i32_1] : memref<1x2048xf32, #tpu.memory_space<any>> -> memref<1x2048xf32, #tpu.memory_space<any>>
    %c0_i32_2 = arith.constant 0 : i32
    %c0_i32_3 = arith.constant 0 : i32
    %1 = tpu.memref_slice %arg1[%c0_i32_2, %c0_i32_3] : memref<1x2048xf32, #tpu.memory_space<any>> -> memref<1x2048xf32, #tpu.memory_space<any>>
    %2 = tpu.memref_slice %arg2[%c0_i32] : memref<1x!tpu.dma_semaphore, #tpu.memory_space<semaphore_mem>> -> memref<1x!tpu.dma_semaphore, #tpu.memory_space<semaphore_mem>>
    %3 = tpu.memref_squeeze %2 : memref<1x!tpu.dma_semaphore, #tpu.memory_space<semaphore_mem>> -> memref<!tpu.dma_semaphore, #tpu.memory_space<semaphore_mem>>
    tpu.enqueue_dma source(%0 : memref<1x2048xf32, #tpu.memory_space<any>>) target(%1 : memref<1x2048xf32, #tpu.memory_space<any>>) target_semaphore(%3 : memref<!tpu.dma_semaphore, #tpu.memory_space<semaphore_mem>>)
    %c0_i32_4 = arith.constant 0 : i32
    %c0_i32_5 = arith.constant 0 : i32
    %c0_i32_6 = arith.constant 0 : i32
    %4 = tpu.memref_slice %arg0[%c0_i32_5, %c0_i32_6] : memref<1x2048xf32, #tpu.memory_space<any>> -> memref<1x2048xf32, #tpu.memory_space<any>>
    %c0_i32_7 = arith.constant 0 : i32
    %c0_i32_8 = arith.constant 0 : i32
    %5 = tpu.memref_slice %arg1[%c0_i32_7, %c0_i32_8] : memref<1x2048xf32, #tpu.memory_space<any>> -> memref<1x2048xf32, #tpu.memory_space<any>>
    %6 = tpu.memref_slice %arg2[%c0_i32_4] : memref<1x!tpu.dma_semaphore, #tpu.memory_space<semaphore_mem>> -> memref<1x!tpu.dma_semaphore, #tpu.memory_space<semaphore_mem>>
    %7 = tpu.memref_squeeze %6 : memref<1x!tpu.dma_semaphore, #tpu.memory_space<semaphore_mem>> -> memref<!tpu.dma_semaphore, #tpu.memory_space<semaphore_mem>>
    tpu.wait_dma2 semaphore(%7 : memref<!tpu.dma_semaphore, #tpu.memory_space<semaphore_mem>>) src(%4 : memref<1x2048xf32, #tpu.memory_space<any>>) dst(%5 : memref<1x2048xf32, #tpu.memory_space<any>>)
    return
  }
}

</mosaic_0001>

<llo_original>
// kernel: tpu_custom_call.1
$region0: #{tpu_custom_call.1}
  #allocation0 [shape = 'u32[]', space=smem, size = 0x4, offset = 0x4, fixed_abs, tag = 'smem constant byte address 0x4 - core index']
  #allocation1 [shape = 'u32[144,128]{1,0:T(1,128)}', space=vmem, size = 0x12000, scoped, tag = 'internal scratch']
  #allocation2 [shape = 's32[1]{0}', space=sflag, size = 0x4, scoped, tag = 'scratch operand']
  #allocation3 [shape = 's32[]', space=sflag, size = 0x4, offset = 0, fixed_abs, tag = 'sflag constant byte address 0x0 - dummy sync flag']
  #allocation4 [shape = 'u32[0]{0}', space=smem, size = 0, offset = 0, fixed_abs, tag = 'smem constant byte address 0x0 - null']
  %s0 = inlined_call_operand.hbm [shape: f32[1,2048], index: 0, kind: input, shape index: {}]
  %s1 = inlined_call_operand.hbm [shape: f32[1,2048], index: 1, kind: output, shape index: {}]
  %s2 = sld [smem:[#allocation0]]
  $region2: #{tpu_custom_call.1} parent=0
    _
  %s4 = ssub.s32 1, %s2
  %s5 = scalar_select 0, %s4, %s2
  %s7 = sshll.u32 1, 14
  %s8 = sxor.u32 4294967295, %s7
  %s11 = sshll.u32 3, 24
  %s12 = sxor.u32 4294967295, %s11
  %s13 = sand.u32 0, %s12
  %s15 = sor.u32 %s13, 0
  %18 = dma.general %s0, 256, %s1, [#allocation2], [#allocation3], [#allocation4], %s15, 0
  %s19 = smul.u32 1, 16
  %s20 = sshll.u32 %s19, 4
  %21 = dma.done [#allocation2], %s20
  %22 = vsyncmov [#allocation2]
  %s23 = vpop.sfrf %22
  %p24 = scmp.eq.s32.totalorder %s23, 0
  %p25 = pneg %p24
  %27 = shalt.err (%p25)

</llo_original>
